<compile_context>
chip_gen: v7x
topology: tpu7x:2x2x1
jax: 0.10.0
libtpu: 0.0.40
codegen_flags: <defaults>
</compile_context>

<pallas_src>
import functools
import math

import jax
import jax.numpy as jnp
from jax.experimental import pallas as pl
from jax.experimental.pallas import tpu as pltpu


# ----------------------------------------------------------------------------
# In-kernel helpers (traced inside Pallas kernel bodies) — f32 math
# ----------------------------------------------------------------------------
def _layernorm(x, gamma, beta, eps=1e-5):
    mu = jnp.mean(x, axis=-1, keepdims=True)
    var = jnp.mean(jnp.square(x - mu), axis=-1, keepdims=True)
    return (x - mu) * jax.lax.rsqrt(var + eps) * gamma + beta


def _new_gelu(x):
    c = math.sqrt(2.0 / math.pi)
    return 0.5 * x * (1.0 + jnp.tanh(c * (x + 0.044715 * x * x * x)))


def _heads_to_front(x):
    """(S, H, dh) -> (H, S, dh); lane (dh) dim unchanged."""
    try:
        return pltpu.einshape("shd->hsd", x)
    except Exception:
        return jnp.swapaxes(x, 0, 1)


def _heads_to_back(x):
    """(H, S, dh) -> (S, H, dh); lane (dh) dim unchanged."""
    try:
        return pltpu.einshape("hsd->shd", x)
    except Exception:
        return jnp.swapaxes(x, 0, 1)


# ----------------------------------------------------------------------------
# Kernel 1: Conv1d embedding as an im2col matmul; (PE + conv bias) fused into
# the epilogue.  patches: (N, L, C_in*K) bf16; w: (C_in*K, D) bf16;
# pe_plus_bias: (L, D) f32.  Output is bf16 (halves the HBM hand-off).
# ----------------------------------------------------------------------------
def conv_embed_kernel(p_ref, w_ref, pe_ref, o_ref):
    acc = jnp.dot(p_ref[0], w_ref[...], preferred_element_type=jnp.float32)
    o_ref[0] = (acc + pe_ref[...]).astype(o_ref.dtype)


def _pick_seq_tile(L, cap=1024):
    if L <= cap:
        return L
    for t in (1024, 768, 512, 384, 256, 128, 64, 32, 16, 8):
        if L % t == 0:
            return t
    # TODO(synk): masked-tail handling for lengths with no aligned divisor.
    return L


def conv_embed(patches, w, pe_plus_bias):
    N, L, CK = patches.shape
    D = w.shape[1]
    TL = _pick_seq_tile(L)
    return pl.pallas_call(
        conv_embed_kernel,
        grid=(N, L // TL),
        in_specs=[
            pl.BlockSpec((1, TL, CK), lambda n, j: (n, j, 0)),
            pl.BlockSpec((CK, D), lambda n, j: (0, 0)),
            pl.BlockSpec((TL, D), lambda n, j: (j, 0)),
        ],
        out_specs=pl.BlockSpec((1, TL, D), lambda n, j: (n, j, 0)),
        out_shape=jax.ShapeDtypeStruct((N, L, D), jnp.bfloat16),
        compiler_params=pltpu.CompilerParams(
            dimension_semantics=("parallel", "parallel")),
    )(patches, w, pe_plus_bias)


# ----------------------------------------------------------------------------
# Kernel 2: the full stack of EncoderBlocks fused into one pallas_call.
#   grid = (batch_tile, layer).  The (TB, S, D) output block has a batch-only
#   index map, so it stays resident in VMEM across the layer axis and carries
#   the residual stream from layer to layer.
# ----------------------------------------------------------------------------
def encoder_stack_kernel(
    x_ref,
    ln1g_ref, ln1b_ref,
    wqkv_ref, bqkv_ref,
    wo_ref, bo_ref,
    rng_ref, rnb_ref,
    w1_ref, b1_ref, w2_ref, b2_ref,
    o_ref, aw_ref,
    *, num_heads,
):
    layer = pl.program_id(1)

    # Seed the VMEM-resident residual stream with this tile's embeddings.
    @pl.when(layer == 0)
    def _():
        o_ref[...] = x_ref[...].astype(jnp.float32)

    x = o_ref[...]                                  # (TB, S, D) f32 carry
    TB, S, D = x.shape
    H = num_heads
    dh = D // H

    # EncoderBlock: h = layernorm_1(x)
    h = _layernorm(x, ln1g_ref[0], ln1b_ref[0])
    h2 = h.reshape(TB * S, D).astype(jnp.bfloat16)

    # nn.MultiheadAttention — fused QKV in-projection on the (TB*S, D) slab.
    # (1/sqrt(dh) is folded into the q columns of wqkv/bqkv at init time.)
    qkv = (jnp.dot(h2, wqkv_ref[0], preferred_element_type=jnp.float32)
           + bqkv_ref[0]).reshape(TB, S, 3 * D)

    ctx_rows = []
    for b in range(TB):                             # static unroll (TB small)
        qkv_b = qkv[b].astype(jnp.bfloat16)         # (S, 3D)
        q = _heads_to_front(qkv_b[:, :D].reshape(S, H, dh))        # (H, S, dh)
        k = _heads_to_front(qkv_b[:, D:2 * D].reshape(S, H, dh))
        v = _heads_to_front(qkv_b[:, 2 * D:].reshape(S, H, dh))

        # Batched-over-heads attention: lane-dense MXU matmuls, no per-head
        # column slices or masked partial stores.
        # TODO(synk): flash-tile over KV blocks for S >~ 1024 (v7x VMEM).
        sc = jnp.einsum("hqd,hkd->hqk", q, k,
                        preferred_element_type=jnp.float32)        # (H, S, S)
        sc = sc - jnp.max(sc, axis=-1, keepdims=True)
        e = jnp.exp(sc)
        p = e / jnp.sum(e, axis=-1, keepdims=True)  # exact softmax (aw fidelity)

        # average_attn_weights=True: mean over heads, straight to the output.
        aw_ref[0, b] = jnp.sum(p, axis=0) * (1.0 / H)

        ctx = jnp.einsum("hqk,hkd->hqd", p.astype(jnp.bfloat16), v,
                         preferred_element_type=jnp.float32)       # (H, S, dh)
        ctx_rows.append(_heads_to_back(ctx.astype(jnp.bfloat16)).reshape(S, D))

    ctx_all = ctx_rows[0] if TB == 1 else jnp.concatenate(ctx_rows, axis=0)
    attn = (jnp.dot(ctx_all, wo_ref[0], preferred_element_type=jnp.float32)
            + bo_ref[0]).reshape(TB, S, D)

    # ResidualBlock: y = LayerNorm(h + MHA(h))   (dropout = identity in eval)
    y = _layernorm(h + attn, rng_ref[0], rnb_ref[0])
    y2 = y.reshape(TB * S, D).astype(jnp.bfloat16)

    # PositionWiseFeedForward: w2(NewGELU(w1(y)))
    # TODO(synk): tile over FF chunks for large (S, FF) on v7x's 64 MiB VMEM.
    ff = _new_gelu(jnp.dot(y2, w1_ref[0], preferred_element_type=jnp.float32)
                   + b1_ref[0])
    ff = (jnp.dot(ff.astype(jnp.bfloat16), w2_ref[0],
                  preferred_element_type=jnp.float32) + b2_ref[0])

    # EncoderBlock: out = y + FFN(y)
    o_ref[...] = y + ff.reshape(TB, S, D)


def _vmem_capacity_bytes():
    try:
        return int(pltpu.get_tpu_info().vmem_capacity_bytes)
    except Exception:
        return 128 * 2 ** 20                       # v5e / v6e physical VMEM


def _stack_vmem_estimate(TB, S, D, FF, H):
    io = (2 * TB * S * D * 2                       # bf16 x block (double-buffered)
          + 2 * TB * S * D * 4                     # f32 resident carry/out block
          + 2 * TB * S * S * 4)                    # f32 attention-weight block
    weights = 2 * 2 * (3 * D * D + D * D + D * FF + FF * D)   # bf16, 2 buffers
    small = 2 * 4 * (3 * D + 6 * D + FF)
    inter = (TB * S * D * 4                        # h = LN1(x)
             + TB * S * 3 * D * 4                  # qkv f32
             + 3 * TB * S * D * 2                  # head-major q/k/v bf16 copies
             + 3 * H * S * S * 4                   # score / exp / probs f32
             + H * S * S * 2                       # probs bf16
             + TB * S * D * 2                      # ctx bf16
             + 2 * TB * S * D * 4                  # attn_out + y f32
             + TB * S * FF * 4 + TB * S * FF * 2   # FFN activation f32 + bf16
             + TB * S * D * 4)                     # FFN output f32
    return io + weights + small + inter


def encoder_stack(x, p):
    B, S, D = x.shape
    nL = p["wqkv"].shape[0]
    FF = p["w1"].shape[2]
    H = p["num_heads"]
    assert D % H == 0

    cap = _vmem_capacity_bytes()
    usable = max(32 * 2 ** 20, cap - 16 * 2 ** 20)  # headroom for Mosaic scratch

    # Largest batch tile (divisor of B) whose full working set fits comfortably.
    TB = 1
    for d in range(B, 0, -1):
        if B % d == 0 and _stack_vmem_estimate(d, S, D, FF, H) <= 0.7 * usable:
            TB = d
            break
    est = _stack_vmem_estimate(TB, S, D, FF, H)
    vmem_limit = int(min(usable, max(32 * 2 ** 20, 2 * est)))

    def lspec(*shape):
        nd = len(shape)
        return pl.BlockSpec((1,) + tuple(shape),
                            lambda b, l, _nd=nd: (l,) + (0,) * _nd)

    kernel = functools.partial(encoder_stack_kernel, num_heads=H)
    h_out, aw = pl.pallas_call(
        kernel,
        grid=(B // TB, nL),
        in_specs=[
            pl.BlockSpec((TB, S, D), lambda b, l: (b, 0, 0)),
            lspec(1, D), lspec(1, D),
            lspec(D, 3 * D), lspec(1, 3 * D),
            lspec(D, D), lspec(1, D),
            lspec(1, D), lspec(1, D),
            lspec(D, FF), lspec(1, FF),
            lspec(FF, D), lspec(1, D),
        ],
        out_specs=[
            pl.BlockSpec((TB, S, D), lambda b, l: (b, 0, 0)),
            pl.BlockSpec((1, TB, S, S), lambda b, l: (l, b, 0, 0)),
        ],
        out_shape=[
            jax.ShapeDtypeStruct((B, S, D), jnp.float32),
            jax.ShapeDtypeStruct((nL, B, S, S), jnp.float32),
        ],
        compiler_params=pltpu.CompilerParams(
            dimension_semantics=("parallel", "arbitrary"),
            vmem_limit_bytes=vmem_limit),
    )(
        x,
        p["ln1_g"], p["ln1_b"],
        p["wqkv"], p["bqkv"],
        p["wo"], p["bo"],
        p["rn_g"], p["rn_b"],
        p["w1"], p["b1"], p["w2"], p["b2"],
    )
    return h_out, aw


# ----------------------------------------------------------------------------
# Plain-JAX glue: im2col, sinusoidal PE, param init, top-level forward wrapper
# ----------------------------------------------------------------------------
def im2col_1d(x, K):
    # x: (N, C_in, L); 'same' padding (PyTorch padding=K//2 for odd K)
    N, C, L = x.shape
    pad_l = K // 2
    xp = jnp.pad(x, ((0, 0), (0, 0), (pad_l, K - 1 - pad_l)))
    cols = jnp.stack([xp[:, :, k:k + L] for k in range(K)], axis=2)  # (N,C,K,L)
    return jnp.transpose(cols, (0, 3, 1, 2)).reshape(N, L, C * K)


def sinusoidal_pe(S, D):
    pos = jnp.arange(S, dtype=jnp.float32)[:, None]
    i = jnp.arange(0, D, 2, dtype=jnp.float32)
    div = jnp.exp(-(jnp.log(10000.0)) * i / D)
    pe = jnp.zeros((S, D), jnp.float32)
    pe = pe.at[:, 0::2].set(jnp.sin(pos * div))
    pe = pe.at[:, 1::2].set(jnp.cos(pos * div))
    return pe


def init_params(key, input_features, d_model, d_ff, n_heads, n_layers, K):
    # Matmul weights in bf16 (MXU-native); biases / LN params in f32.
    dh = d_model // n_heads
    q_scale = 1.0 / math.sqrt(dh)

    def nrm(k, shape, scale=0.02):
        return scale * jax.random.normal(k, shape, dtype=jnp.float32)

    ks = jax.random.split(key, 6)

    wqkv = nrm(ks[1], (n_layers, d_model, 3 * d_model))
    wqkv = wqkv.at[:, :, :d_model].multiply(q_scale)     # fold 1/sqrt(dh) into q
    bqkv = jnp.zeros((n_layers, 1, 3 * d_model), jnp.float32)
    bqkv = bqkv.at[:, :, :d_model].multiply(q_scale)

    return {
        "num_heads": n_heads,
        "conv_w": nrm(ks[0], (input_features * K, d_model)).astype(jnp.bfloat16),
        "conv_b": jnp.zeros((1, d_model), jnp.float32),
        "ln1_g": jnp.ones((n_layers, 1, d_model), jnp.float32),
        "ln1_b": jnp.zeros((n_layers, 1, d_model), jnp.float32),
        "wqkv": wqkv.astype(jnp.bfloat16),
        "bqkv": bqkv,
        "wo": nrm(ks[2], (n_layers, d_model, d_model)).astype(jnp.bfloat16),
        "bo": jnp.zeros((n_layers, 1, d_model), jnp.float32),
        "rn_g": jnp.ones((n_layers, 1, d_model), jnp.float32),
        "rn_b": jnp.zeros((n_layers, 1, d_model), jnp.float32),
        "w1": nrm(ks[3], (n_layers, d_model, d_ff)).astype(jnp.bfloat16),
        "b1": jnp.zeros((n_layers, 1, d_ff), jnp.float32),
        "w2": nrm(ks[4], (n_layers, d_ff, d_model)).astype(jnp.bfloat16),
        "b2": jnp.zeros((n_layers, 1, d_model), jnp.float32),
    }


def encoder_layer_forward(x, mask, x_time, params, *, use_pe=True):
    """x: (N, C_in, L) channels-first.  Returns (x_out, [per-layer attn weights])."""
    del x_time  # the reference forward only builds (unused) position tensors
    del mask    # TODO(synk): padding-mask path (create_mask / attn_mask) not implemented.
    N, C, L = x.shape
    D = params["conv_w"].shape[1]
    K = params["conv_w"].shape[0] // C

    # CNN embedding (im2col + Pallas matmul) with (PE + conv bias) fused into
    # the epilogue; output layout is already (N, seq, d_model) in bf16.
    patches = im2col_1d(x, K).astype(jnp.bfloat16)
    pe = sinusoidal_pe(L, D) if use_pe else jnp.zeros((L, D), jnp.float32)
    pe_plus_bias = pe + params["conv_b"]
    h = conv_embed(patches, params["conv_w"], pe_plus_bias)

    # All encoder blocks in one fused Pallas kernel.
    h, aw = encoder_stack(h, params)               # aw: (n_layers, N, L, L)
    return h, [aw[i] for i in range(aw.shape[0])]


# ----------------------------------------------------------------------------
if __name__ == "__main__":
    B, C_IN, SEQ = 2, 4, 8
    D_MODEL, D_FF, N_HEADS, N_LAYERS, KSIZE = 32, 256, 4, 2, 3

    key = jax.random.PRNGKey(0)
    k_x, k_p = jax.random.split(key)
    x = jax.random.normal(k_x, (B, C_IN, SEQ), dtype=jnp.float32)
    x_time = jnp.tile(jnp.arange(SEQ, dtype=jnp.int32)[None], (B, 1))
    params = init_params(k_p, C_IN, D_MODEL, D_FF, N_HEADS, N_LAYERS, KSIZE)

    out, attn_list = encoder_layer_forward(x, None, x_time, params, use_pe=True)
    out = jax.block_until_ready(out)
    for a in attn_list:
        jax.block_until_ready(a)

    assert out.shape == (B, SEQ, D_MODEL)
    assert len(attn_list) == N_LAYERS
    assert all(a.shape == (B, SEQ, SEQ) for a in attn_list)
    assert jnp.all(jnp.isfinite(out))
    assert all(jnp.all(jnp.isfinite(a)) for a in attn_list)
    print("KERNEL_OK")
</pallas_src>

<mosaic_0001>
module attributes {stable_mosaic.version = 11 : i64} {
  func.func @conv_embed_kernel(%arg0: i32, %arg1: i32, %arg2: memref<1x8x12xbf16, #tpu.memory_space<vmem>>, %arg3: memref<12x32xbf16, #tpu.memory_space<vmem>>, %arg4: memref<8x32xf32, #tpu.memory_space<vmem>>, %arg5: memref<1x8x32xbf16, #tpu.memory_space<vmem>>) attributes {dimension_semantics = [#tpu.dimension_semantics<parallel>, #tpu.dimension_semantics<parallel>], iteration_bounds = array<i64: 2, 1>, scalar_prefetch = 0 : i64, scratch_operands = 0 : i64, tpu.core_type = #tpu.core_type<tc>, window_params = [{transform_indices = @transform_0, window_bounds = array<i64: 1, 8, 12>}, {pipeline_mode = #tpu.pipeline_mode<synchronous>, transform_indices = @transform_1, window_bounds = array<i64: 12, 32>}, {transform_indices = @transform_2, window_bounds = array<i64: 8, 32>}, {transform_indices = @transform_3, window_bounds = array<i64: 1, 8, 32>}]} {
    %c0 = arith.constant 0 : index
    %c0_0 = arith.constant 0 : index
    %c0_1 = arith.constant 0 : index
    %0 = vector.load %arg2[%c0, %c0_0, %c0_1] : memref<1x8x12xbf16, #tpu.memory_space<vmem>>, vector<1x8x12xbf16>
    %1 = vector.shape_cast %0 : vector<1x8x12xbf16> to vector<8x12xbf16>
    %c0_2 = arith.constant 0 : index
    %c0_3 = arith.constant 0 : index
    %2 = vector.load %arg3[%c0_2, %c0_3] : memref<12x32xbf16, #tpu.memory_space<vmem>>, vector<12x32xbf16>
    %cst = arith.constant dense<0.000000e+00> : vector<8x32xf32>
    %3 = tpu.matmul %1, %2, %cst {dimension_numbers = #tpu.dot_dimension_numbers<[1], [0], [0], [1], [0, 0, 1, 1], [], []>} : vector<8x12xbf16>, vector<12x32xbf16>, vector<8x32xf32> -> vector<8x32xf32>
    %c0_4 = arith.constant 0 : index
    %c0_5 = arith.constant 0 : index
    %4 = vector.load %arg4[%c0_4, %c0_5] : memref<8x32xf32, #tpu.memory_space<vmem>>, vector<8x32xf32>
    %5 = arith.addf %3, %4 : vector<8x32xf32>
    %6 = arith.truncf %5 : vector<8x32xf32> to vector<8x32xbf16>
    %c0_6 = arith.constant 0 : index
    %c0_7 = arith.constant 0 : index
    %c0_8 = arith.constant 0 : index
    %7 = vector.load %arg5[%c0_6, %c0_7, %c0_8] : memref<1x8x32xbf16, #tpu.memory_space<vmem>>, vector<1x8x32xbf16>
    %8 = vector.shape_cast %7 : vector<1x8x32xbf16> to vector<8x32xbf16>
    %9 = vector.shape_cast %6 : vector<8x32xbf16> to vector<1x8x32xbf16>
    tpu.vector_store %arg5[%c0_6, %c0_7, %c0_8], %9 {strides = array<i32>} : memref<1x8x32xbf16, #tpu.memory_space<vmem>>, vector<1x8x32xbf16>,
    return
  }
  func.func @transform_0(%arg0: i32, %arg1: i32) -> (i32, i32, i32) {
    %c0_i32 = arith.constant 0 : i32
    %c0_i32_0 = arith.constant 0 : i32
    return %arg0, %arg1, %c0_i32 : i32, i32, i32
  }
  func.func @transform_1(%arg0: i32, %arg1: i32) -> (i32, i32) {
    %c0_i32 = arith.constant 0 : i32
    %c0_i32_0 = arith.constant 0 : i32
    %c0_i32_1 = arith.constant 0 : i32
    return %c0_i32, %c0_i32_0 : i32, i32
  }
  func.func @transform_2(%arg0: i32, %arg1: i32) -> (i32, i32) {
    %c0_i32 = arith.constant 0 : i32
    %c0_i32_0 = arith.constant 0 : i32
    return %arg1, %c0_i32 : i32, i32
  }
  func.func @transform_3(%arg0: i32, %arg1: i32) -> (i32, i32, i32) {
    %c0_i32 = arith.constant 0 : i32
    %c0_i32_0 = arith.constant 0 : i32
    return %arg0, %arg1, %c0_i32 : i32, i32, i32
  }
}

</mosaic_0001>

<llo_original>
// kernel: tpu_custom_call.1
$region0: #{tpu_custom_call.1}
  #allocation0 [shape = 'u32[]', space=smem, size = 0x4, offset = 0x4, fixed_abs, tag = 'smem constant byte address 0x4 - core index']
  #allocation1 [shape = 'u32[144,128]{1,0:T(1,128)}', space=vmem, size = 0x12000, scoped, tag = 'internal scratch']
  %s0 = inlined_call_operand.hbm [shape: bf16[2,8,12], index: 0, kind: input, shape index: {}]
  %s1 = inlined_call_operand.hbm [shape: bf16[12,32], index: 1, kind: input, shape index: {}]
  %s2 = inlined_call_operand.hbm [shape: f32[8,32], index: 2, kind: input, shape index: {}]
  %s3 = inlined_call_operand.hbm [shape: bf16[2,8,32], index: 3, kind: output, shape index: {}]
  %s4 = sld [smem:[#allocation0]]
  $region57: #{tpu_custom_call.1} parent=0
    _
  %s6 = ssub.s32 1, %s4
  %s7 = scalar_select 0, %s6, %s4
  $region1: #{tpu_custom_call.1} parent=0
    #allocation2 [shape = 'u8[4096]{0}', space=vmem, size = 0x1000, scoped, tag = 'input window, operand 0']
    #allocation3 [shape = 's32[2]{0}', space=sflag, size = 0x8, scoped, tag = 'scoped memory for tpu_custom_call.1']
    #allocation4 [shape = 's32[2]{0}', space=sflag, size = 0x8, scoped, tag = 'scoped memory for tpu_custom_call.1']
    #allocation5 [shape = 'u8[4096]{0}', space=vmem, size = 0x1000, scoped, tag = 'input window, operand 1, single buffered']
    #allocation6 [shape = 's32[1]{0}', space=sflag, size = 0x4, scoped, tag = 'scoped memory for tpu_custom_call.1']
    #allocation7 [shape = 'u8[4096]{0}', space=vmem, size = 0x1000, scoped, tag = 'input window, operand 2, single buffered']
    #allocation8 [shape = 'u8[4096]{0}', space=vmem, size = 0x1000, scoped, tag = 'output window, operand 0']
    %8 = vsyncpa [#allocation3], 0
    %s9 = scalar_lea.sflag [#allocation3], 1
    %10 = vsyncpa %s9, 0
    %11 = vsyncpa [#allocation6], 0
    %12 = vsyncpa [#allocation4], 0
    %s13 = scalar_lea.sflag [#allocation4], 1
    %14 = vsyncpa %s13, 0
    loop: start=0, step=1, limit=4
    $region2: #{tpu_custom_call.1} parent=1 // loop_pre_header
      _
    $region3: #{tpu_custom_call.1} parent=1 // loop_header
      %s16 = sphi 0, %s20
      %p17 = scmp.ge.s32.totalorder %s16, 4
      %s23 = sphi 0, %s35
      %s24 = sphi 0, %s31
      %s25 = sphi 0, %s23
      %s26 = sphi 0, %s24
      %s27 = sphi 0, %s25
      %s28 = sphi 0, %s26
      %s40 = sphi 0, %s42
      %s43 = sphi 0, %s40
      %s44 = sphi 0, %s43
      %s60 = sphi 0, %s44
      %s64 = sphi 0, %s64
      %s66 = sphi 0, %s64
      %s67 = sphi 0, %s66
      %s81 = sphi 0, %s67
      %s87 = sphi 0, %s89
      %s90 = sphi 0, %s87
      %s91 = sphi 0, %s90
      %s107 = sphi 0, %s91
      %s115 = sphi 0, %s117
      %s118 = sphi 0, %s115
      %s119 = sphi 0, %s118
      %s135 = sphi 0, %s119
    $region4: #{tpu_custom_call.1} parent=1 // loop_header_branch
      %19 = sbr.rel (%p17) target = $region8
    $region5: #{tpu_custom_call.1} parent=1 // loop_body
      %s21 = ssub.s32 %s16, 1
      %s22 = ssub.s32 %s16, 2
      %s29 = sadd.s32 1, %s24
      %p30 = scmp.ge.s32.totalorder %s29, 1
      %s31 = scalar_select %p30, 0, %s29
      %s32 = sadd.s32 1, %s23
      %s33 = scalar_select %p30, %s32, %s23
      %p34 = scmp.ge.s32.totalorder %s33, 2
      %s35 = scalar_select %p34, 0, %s33
      %s36 = ssub.s32 %s23, %s35
      %s37 = ssub.s32 %s24, %s31
      %s38 = sor.u32 %s36, %s37
      %p39 = scmp.eq.s32.totalorder %s38, 0
      %s41 = sadd.s32 %s40, 1
      %s42 = scalar_select %p39, %s40, %s41
      %p45 = pneg %p39
      %p46 = scmp.eq.s32.totalorder %s16, 1
      %p47 = por %p45, %p46
      %p48 = scmp.ne.s32.totalorder %s40, %s43
      %p49 = scmp.eq.s32.totalorder %s16, 0
      %p50 = por %p48, %p49
      %p51 = scmp.ne.s32.totalorder %s40, %s43
      %p52 = scmp.eq.s32.totalorder %s21, 1
      %p53 = por %p51, %p52
      %p54 = scmp.ne.s32.totalorder %s43, %s44
      %p55 = scmp.eq.s32.totalorder %s21, 0
      %p56 = por %p54, %p55
      %p57 = scmp.ne.s32.totalorder %s43, %s44
      %p58 = scmp.eq.s32.totalorder %s22, 1
      %p59 = por %p57, %p58
      %p61 = scmp.ne.s32.totalorder %s44, %s60
      %p62 = scmp.eq.s32.totalorder %s22, 0
      %p63 = por %p61, %p62
      %s65 = sadd.s32 %s64, 1
      %p68 = scmp.eq.s32.totalorder %s16, 1
      %p69 = scmp.ne.s32.totalorder %s64, %s66
      %p70 = scmp.eq.s32.totalorder %s16, 0
      %p71 = por %p69, %p70
      %p72 = scmp.ne.s32.totalorder %s64, %s66
      %p73 = scmp.eq.s32.totalorder %s21, 1
      %p74 = por %p72, %p73
      %p75 = scmp.ne.s32.totalorder %s66, %s67
      %p76 = scmp.eq.s32.totalorder %s21, 0
      %p77 = por %p75, %p76
      %p78 = scmp.ne.s32.totalorder %s66, %s67
      %p79 = scmp.eq.s32.totalorder %s22, 1
      %p80 = por %p78, %p79
      %p82 = scmp.ne.s32.totalorder %s67, %s81
      %p83 = scmp.eq.s32.totalorder %s22, 0
      %p84 = por %p82, %p83
      %s85 = ssub.s32 %s24, %s31
      %p86 = scmp.eq.s32.totalorder %s85, 0
      %s88 = sadd.s32 %s87, 1
      %s89 = scalar_select %p86, %s87, %s88
      %p92 = pneg %p86
      %p93 = scmp.eq.s32.totalorder %s16, 1
      %p94 = por %p92, %p93
      %p95 = scmp.ne.s32.totalorder %s87, %s90
      %p96 = scmp.eq.s32.totalorder %s16, 0
      %p97 = por %p95, %p96
      %p98 = scmp.ne.s32.totalorder %s87, %s90
      %p99 = scmp.eq.s32.totalorder %s21, 1
      %p100 = por %p98, %p99
      %p101 = scmp.ne.s32.totalorder %s90, %s91
      %p102 = scmp.eq.s32.totalorder %s21, 0
      %p103 = por %p101, %p102
      %p104 = scmp.ne.s32.totalorder %s90, %s91
      %p105 = scmp.eq.s32.totalorder %s22, 1
      %p106 = por %p104, %p105
      %p108 = scmp.ne.s32.totalorder %s91, %s107
      %p109 = scmp.eq.s32.totalorder %s22, 0
      %p110 = por %p108, %p109
      %s111 = ssub.s32 %s23, %s35
      %s112 = ssub.s32 %s24, %s31
      %s113 = sor.u32 %s111, %s112
      %p114 = scmp.eq.s32.totalorder %s113, 0
      %s116 = sadd.s32 %s115, 1
      %s117 = scalar_select %p114, %s115, %s116
      %p120 = pneg %p114
      %p121 = scmp.eq.s32.totalorder %s16, 1
      %p122 = por %p120, %p121
      %p123 = scmp.ne.s32.totalorder %s115, %s118
      %p124 = scmp.eq.s32.totalorder %s16, 0
      %p125 = por %p123, %p124
      %p126 = scmp.ne.s32.totalorder %s115, %s118
      %p127 = scmp.eq.s32.totalorder %s21, 1
      %p128 = por %p126, %p127
      %p129 = scmp.ne.s32.totalorder %s118, %s119
      %p130 = scmp.eq.s32.totalorder %s21, 0
      %p131 = por %p129, %p130
      %p132 = scmp.ne.s32.totalorder %s118, %s119
      %p133 = scmp.eq.s32.totalorder %s22, 1
      %p134 = por %p132, %p133
      %p136 = scmp.ne.s32.totalorder %s119, %s135
      %p137 = scmp.eq.s32.totalorder %s22, 0
      %p138 = por %p136, %p137
      %p139 = scmp.le.s32.totalorder 1, %s16
      %p140 = scmp.lt.s32.totalorder %s16, 3
      %p141 = pnand %p139, %p140
      %p142 = pneg %p141
      // Predicated region
      $region9: #{tpu_custom_call.1} parent=5 // pred_check
        _
      $region10: #{tpu_custom_call.1} parent=5 // pred_check_branch
        %144 = sbr.rel (%p141) target = $region12
      $region11: #{tpu_custom_call.1} parent=5 // pred_region
        %s145 = ssub.s32 %s16, 1
        // Predicated region
        $region13: #{tpu_custom_call.1} parent=11 // pred_check
          %p146 = pneg %p77
        $region14: #{tpu_custom_call.1} parent=11 // pred_check_branch
          %148 = sbr.rel (%p146) target = $region16
        $region15: #{tpu_custom_call.1} parent=11 // pred_region
          %s150 = ssub.s32 128, 128
          %151 = vsyncadd [#allocation6], %s150
          %s152 = sshll.u32 [#allocation5], 4
          %s153 = int_to_ptr.vmem [resolvable:$true] %s152
          %158 = dma.hbm_to_vmem [thread:$0]  %s1, 128, %s153, [#allocation6], 64, 64, 4
        $region16: #{tpu_custom_call.1} parent=11 // pred_fallthru
          _
        // Predicated region
        $region17: #{tpu_custom_call.1} parent=11 // pred_check
          %p159 = pneg %p103
        $region18: #{tpu_custom_call.1} parent=11 // pred_check_branch
          %161 = sbr.rel (%p159) target = $region20
        $region19: #{tpu_custom_call.1} parent=11 // pred_region
          %s163 = ssub.s32 128, 128
          %164 = vsyncadd [#allocation6], %s163
          %s165 = smul.addr %s26, 128
          %s166 = scalar_lea.hbm %s2, %s165
          %s168 = sshll.u32 [#allocation7], 4
          %s169 = int_to_ptr.vmem [resolvable:$true] %s168
          %171 = dma.hbm_to_vmem [thread:$0]  %s166, 128, %s169, [#allocation6]
        $region20: #{tpu_custom_call.1} parent=11 // pred_fallthru
          _
      $region12: #{tpu_custom_call.1} parent=5 // pred_fallthru
        _
      %p172 = scmp.lt.s32.totalorder %s16, 2
      // Predicated region
      $region21: #{tpu_custom_call.1} parent=5 // pred_check
        %p173 = pneg %p172
      $region22: #{tpu_custom_call.1} parent=5 // pred_check_branch
        %175 = sbr.rel (%p173) target = $region24
      $region23: #{tpu_custom_call.1} parent=5 // pred_region
        // Predicated region
        $region25: #{tpu_custom_call.1} parent=23 // pred_check
          %p176 = pneg %p50
        $region26: #{tpu_custom_call.1} parent=23 // pred_check_branch
          %178 = sbr.rel (%p176) target = $region28
        $region27: #{tpu_custom_call.1} parent=23 // pred_region
          %s179 = sand.u32 %s40, 1
          %s180 = scalar_lea.sflag [#allocation3], %s179
          %s181 = sand.u32 %s40, 1
          %s182 = smul.addr %s181, 4
          %s183 = scalar_lea.vmem [#allocation2], %s182
          %s185 = ssub.s32 64, 64
          %186 = vsyncadd %s180, %s185
          %s187 = sadd.s32 %s24, %s23
          %s188 = smul.addr %s187, 64
          %s189 = scalar_lea.hbm %s0, %s188
          %s191 = sshll.u32 %s183, 4
          %s192 = int_to_ptr.vmem [resolvable:$true] %s191
          %194 = dma.hbm_to_vmem [thread:$0]  %s189, 64, %s192, %s180
        $region28: #{tpu_custom_call.1} parent=23 // pred_fallthru
          _
      $region24: #{tpu_custom_call.1} parent=5 // pred_fallthru
        _
      %p195 = scmp.le.s32.totalorder 1, %s16
      %p196 = scmp.lt.s32.totalorder %s16, 3
      %p197 = pnand %p195, %p196
      %p198 = pneg %p197
      // Predicated region
      $region29: #{tpu_custom_call.1} parent=5 // pred_check
        _
      $region30: #{tpu_custom_call.1} parent=5 // pred_check_branch
        %200 = sbr.rel (%p197) target = $region32
      $region31: #{tpu_custom_call.1} parent=5 // pred_region
        %s201 = ssub.s32 %s16, 1
        %s202 = sand.u32 %s43, 1
        %s203 = scalar_lea.sflag [#allocation3], %s202
        %s204 = sand.u32 %s43, 1
        %s205 = smul.addr %s204, 4
        %s206 = scalar_lea.vmem [#allocation2], %s205
        // Predicated region
        $region33: #{tpu_custom_call.1} parent=31 // pred_check
          %p207 = pneg %p56
        $region34: #{tpu_custom_call.1} parent=31 // pred_check_branch
          %209 = sbr.rel (%p207) target = $region36
        $region35: #{tpu_custom_call.1} parent=31 // pred_region
          %210 = dma.done %s203, 64
        $region36: #{tpu_custom_call.1} parent=31 // pred_fallthru
          _
        // Predicated region
        $region37: #{tpu_custom_call.1} parent=31 // pred_check
          %p211 = pneg %p77
        $region38: #{tpu_custom_call.1} parent=31 // pred_check_branch
          %213 = sbr.rel (%p211) target = $region40
        $region39: #{tpu_custom_call.1} parent=31 // pred_region
          %214 = dma.done [#allocation6], 128
        $region40: #{tpu_custom_call.1} parent=31 // pred_fallthru
          _
        // Predicated region
        $region41: #{tpu_custom_call.1} parent=31 // pred_check
          %p215 = pneg %p103
        $region42: #{tpu_custom_call.1} parent=31 // pred_check_branch
          %217 = sbr.rel (%p215) target = $region44
        $region43: #{tpu_custom_call.1} parent=31 // pred_region
          %218 = dma.done [#allocation6], 128
        $region44: #{tpu_custom_call.1} parent=31 // pred_fallthru
          _
        %s219 = sand.u32 %s43, 1
        %s220 = scalar_lea.sflag [#allocation3], %s219
        %s221 = sand.u32 %s43, 1
        %s222 = smul.addr %s221, 4
        %s223 = scalar_lea.vmem [#allocation2], %s222
        %p224 = pneg %p56
        %p225 = pneg %p53
        %p226 = pneg %p77
        %p227 = pneg %p74
        %p228 = pneg %p103
        %p229 = pneg %p100
        %p230 = pneg %p131
        %p231 = pneg %p128
        %s232 = sand.u32 %s118, 1
        %s233 = scalar_lea.sflag [#allocation4], %s232
        %s234 = sand.u32 %s118, 1
        %s235 = smul.addr %s234, 4
        %s236 = scalar_lea.vmem [#allocation8], %s235
        %v238 = vld [vmem:[%s206] sm:$0xf]
        %v239 = vld [vmem:[#allocation5] sm:$0xf]
        %v240 = vld [vmem:[#allocation5 + $0x4] sm:$0x3]
        %v241 = vld [vmem:[#allocation7] sm:$0xff]
        %v244 = vunpack.c.l.b16 %v239
        %v245 = vunpack.c.l.b16 %v240
        %v246 = vpack.c.b16 %v245, %v244
        %vm247 = vcmask 97280
        %v249 = vsel %vm247, %v238, 0
        %vm251 = vcmask 1045504
        %v253 = vsel %vm251, %v246, 0
        %255 = vmatprep.subr.bf16.mxu0 0
        %256 = vmatpush1.bf16.msra.mxu0 %v253
        %257 = vmatprep.subr.bf16.mxu0 0
        %258 = vmatpush1.bf16.msra.mxu0 0
        %259 = vmatprep.subr.bf16.mxu0 0
        %260 = vmatpush1.bf16.msra.mxu0 0
        %261 = vmatprep.subr.bf16.mxu0 0
        %262 = vmatpush1.bf16.msra.mxu0 0
        %263 = vmatprep.subr.bf16.mxu0 0
        %264 = vmatpush1.bf16.msra.mxu0 0
        %265 = vmatprep.subr.bf16.mxu0 0
        %266 = vmatpush1.bf16.msra.mxu0 0
        %267 = vmatprep.subr.bf16.mxu0 0
        %268 = vmatpush1.bf16.msra.mxu0 0
        %269 = vmatprep.subr.bf16.mxu0 0
        %270 = vmatpush1.bf16.msra.mxu0 0
        %271 = vmatprep.subr.bf16.mxu0 0
        %272 = vmatpush1.bf16.msra.mxu0 0
        %273 = vmatprep.subr.bf16.mxu0 0
        %274 = vmatpush1.bf16.msra.mxu0 0
        %275 = vmatprep.subr.bf16.mxu0 0
        %276 = vmatpush1.bf16.msra.mxu0 0
        %277 = vmatprep.subr.bf16.mxu0 0
        %278 = vmatpush1.bf16.msra.mxu0 0
        %279 = vmatprep.subr.bf16.mxu0 0
        %280 = vmatpush1.bf16.msra.mxu0 0
        %281 = vmatprep.subr.bf16.mxu0 0
        %282 = vmatpush1.bf16.msra.mxu0 0
        %283 = vmatprep.subr.bf16.mxu0 0
        %284 = vmatpush1.bf16.msra.mxu0 0
        %285 = vmatprep.subr.bf16.mxu0 0
        %286 = vmatpush1.bf16.msra.mxu0 0
        %287 = vmatprep.mubr.bf16.mxu0 0
        %288 = vmatmul.mubr.bf16.gmra.mrb[0].mxu0 %v249
        %v289 = vpop.f32.mrb[0].mxu0
        %v290 = vadd.f32 %v241, %v289
        %v291 = vpop.f32.mrb[0].mxu0
        %v292 = vpop.f32.mrb[0].mxu0
        %v293 = vpop.f32.mrb[0].mxu0
        %294 = vdwg.mxu0
        %v295 = vpack.c.bf16 %v290, %v290
        %vm296 = vcmask 257024
        %297 = vst.msk [vmem:[%s236] sm:$0xf] %vm296, %v295
        %s298 = sand.u32 %s118, 1
        %s299 = scalar_lea.sflag [#allocation4], %s298
        %s300 = sand.u32 %s118, 1
        %s301 = smul.addr %s300, 4
        %s302 = scalar_lea.vmem [#allocation8], %s301
        // Predicated region
        $region45: #{tpu_custom_call.1} parent=31 // pred_check
          %p303 = pneg %p128
        $region46: #{tpu_custom_call.1} parent=31 // pred_check_branch
          %305 = sbr.rel (%p303) target = $region48
        $region47: #{tpu_custom_call.1} parent=31 // pred_region
          %s307 = ssub.s32 64, 64
          %308 = vsyncadd %s299, %s307
          %s309 = sadd.s32 %s26, %s25
          %s310 = smul.addr %s309, 64
          %s311 = scalar_lea.hbm %s3, %s310
          %s313 = sshll.u32 %s302, 4
          %s314 = int_to_ptr.vmem [resolvable:$true] %s313
          %316 = dma.vmem_to_hbm [thread:$0]  %s314, 64, %s311, %s299
        $region48: #{tpu_custom_call.1} parent=31 // pred_fallthru
          _
      $region32: #{tpu_custom_call.1} parent=5 // pred_fallthru
        _
      %p317 = scmp.le.s32.totalorder 2, %s16
      // Predicated region
      $region49: #{tpu_custom_call.1} parent=5 // pred_check
        %p318 = pneg %p317
      $region50: #{tpu_custom_call.1} parent=5 // pred_check_branch
        %320 = sbr.rel (%p318) target = $region52
      $region51: #{tpu_custom_call.1} parent=5 // pred_region
        %s321 = ssub.s32 %s16, 2
        // Predicated region
        $region53: #{tpu_custom_call.1} parent=51 // pred_check
          %p322 = pneg %p134
        $region54: #{tpu_custom_call.1} parent=51 // pred_check_branch
          %324 = sbr.rel (%p322) target = $region56
        $region55: #{tpu_custom_call.1} parent=51 // pred_region
          %s325 = sand.u32 %s119, 1
          %s326 = scalar_lea.sflag [#allocation4], %s325
          %s327 = sand.u32 %s119, 1
          %s328 = smul.addr %s327, 4
          %s329 = scalar_lea.vmem [#allocation8], %s328
          %330 = dma.done %s326, 64
        $region56: #{tpu_custom_call.1} parent=51 // pred_fallthru
          _
      $region52: #{tpu_custom_call.1} parent=5 // pred_fallthru
        _
    $region6: #{tpu_custom_call.1} parent=1 // loop_footer
      %s20 = sadd.s32 1, %s16
    $region7: #{tpu_custom_call.1} parent=1 // loop_footer_branch
      %15 = sbr.rel target = $region3
    $region8: #{tpu_custom_call.1} parent=1 // loop_exit
      _
    %331 = vsyncpa [#allocation3], 1
    %s332 = scalar_lea.sflag [#allocation3], 1
    %333 = vsyncpa %s332, 1
    %334 = vsyncpa [#allocation6], 1
    %335 = vsyncpa [#allocation4], 1
    %s336 = scalar_lea.sflag [#allocation4], 1
    %337 = vsyncpa %s336, 1

</llo_original>
